<compile_context>
chip_gen: v5e
topology: v5e:2x2
jax: 0.10.0
libtpu: 0.0.40
codegen_flags: <defaults>
</compile_context>

<pallas_src>
import functools

import jax
import jax.numpy as jnp
from jax.experimental import pallas as pl
from jax.experimental.pallas import tpu as pltpu


def _round_up(x, m):
    return (x + m - 1) // m * m


# ---------------------------------------------------------------------------
# Pass 1 (streaming, HBM-bound): score lane j = v . enc_row_j for each row of
# the streamed encoder tile.
#   v_ref:   (1, H)       resident (constant block index -> DMA'd once)
#   enc_ref: (s_tile, H)  streamed over a "parallel" grid axis
#   s_ref:   (1, s_tile)  lane-dense f32 score slab
# ---------------------------------------------------------------------------
def _scores_kernel(v_ref, enc_ref, s_ref):
    # A @ B^T style contraction (both operands contract on their last dim);
    # same pattern as flash-attention q.k^T -> lowers straight to the MXU.
    s_ref[...] = jax.lax.dot_general(
        v_ref[...], enc_ref[...],
        dimension_numbers=(((1,), (1,)), ((), ())),
        preferred_element_type=jnp.float32)


# ---------------------------------------------------------------------------
# Pass 2 (tiny): masked softmax over the full (1, Sp) score row.
# ---------------------------------------------------------------------------
def _softmax_kernel(s_ref, o_ref, *, valid_len):
    s = s_ref[...]                                        # (1, Sp) f32
    lane = jax.lax.broadcasted_iota(jnp.int32, s.shape, 1)
    # Mask BEFORE exp so garbage from ragged/OOB encoder rows can never leak.
    s = jnp.where(lane < valid_len, s, -jnp.inf)
    m = jnp.max(s, axis=-1, keepdims=True)
    e = jnp.exp(s - m)
    o_ref[...] = e / jnp.sum(e, axis=-1, keepdims=True)


def attn_forward(hidden, encoder_outputs, weight, bias):
    """hidden: (H,), encoder_outputs: (S, H), weight: (H, H), bias: (H,).
    Returns attention weights of shape (1, 1, S), matching the PyTorch module."""
    del bias  # hidden.(W enc_s + b) = (hidden@W).enc_s + const; softmax shift-invariant
    H = hidden.shape[0]
    S, He = encoder_outputs.shape
    assert He == H, (He, H)

    # Keep the streamed operand in its native dtype (no wrapper-side cast pass).
    compute_dtype = encoder_outputs.dtype
    itemsize = jnp.dtype(compute_dtype).itemsize

    # v = hidden @ W : a single tiny GEMV -- plain XLA, no dedicated pallas_call.
    v = (hidden[None, :].astype(jnp.float32)
         @ weight.astype(jnp.float32)).astype(compute_dtype)        # (1, H)

    # --- Tile selection: MiB-scale enc blocks so DMA >> per-step overhead. ---
    Hp_layout = _round_up(H, 128)              # lane-padded row footprint in VMEM
    target_bytes = 4 * 1024 * 1024             # ~4 MiB per block (x2 double-buffered)
    s_tile = max(128, (target_bytes // (Hp_layout * itemsize)) // 128 * 128)

    if S <= s_tile:
        # Single full-array block: no S padding, no OOB reads at all.
        grid_n = 1
        s_tile = S
    else:
        grid_n = pl.cdiv(S, s_tile)            # ragged last tile handled by mask
    Sp = grid_n * s_tile

    # Explicit VMEM budget: above v5e/v6e/v7x scoped defaults, < v7x 64 MiB physical.
    enc_block_bytes = s_tile * Hp_layout * itemsize
    vmem_limit = int(min(max(2 * enc_block_bytes + (8 << 20), 32 << 20), 56 << 20))

    # Pass 1: stream encoder_outputs in (s_tile, H) blocks (no padded copy);
    # v stays resident (constant block index); lane-dense (1, s_tile) output.
    scores = pl.pallas_call(
        _scores_kernel,
        out_shape=jax.ShapeDtypeStruct((1, Sp), jnp.float32),
        grid_spec=pltpu.PrefetchScalarGridSpec(
            num_scalar_prefetch=0,
            grid=(grid_n,),
            in_specs=[pl.BlockSpec((1, H), lambda i: (0, 0)),
                      pl.BlockSpec((s_tile, H), lambda i: (i, 0))],
            out_specs=pl.BlockSpec((1, s_tile), lambda i: (0, i)),
        ),
        compiler_params=pltpu.CompilerParams(
            dimension_semantics=("parallel",),   # independent tiles -> v7x megacore
            vmem_limit_bytes=vmem_limit),
        cost_estimate=pl.CostEstimate(
            flops=int(2 * S * H),
            transcendentals=0,
            bytes_accessed=int(S * H * itemsize + H * itemsize + Sp * 4)),
    )(v, encoder_outputs)

    # Pass 2: cross-tile masked softmax over the whole score row (tiny).
    probs = pl.pallas_call(
        functools.partial(_softmax_kernel, valid_len=S),
        out_shape=jax.ShapeDtypeStruct((1, Sp), jnp.float32),
        in_specs=[pl.BlockSpec(memory_space=pltpu.MemorySpace.VMEM)],
        out_specs=pl.BlockSpec(memory_space=pltpu.MemorySpace.VMEM),
    )(scores)

    # .unsqueeze(0).unsqueeze(0) on a length-S vector -> (1, 1, S)
    return probs[:, :S].reshape(1, 1, S)


def attn_forward_ref(hidden, encoder_outputs, weight, bias):
    """Pure-JAX reference mirroring the PyTorch loop."""
    energy = encoder_outputs @ weight.T + bias          # (S, H)
    scores = energy @ hidden                            # (S,)
    return jax.nn.softmax(scores).reshape(1, 1, -1)


if __name__ == "__main__":
    SEQ_LEN = 8
    HIDDEN = 32

    key = jax.random.PRNGKey(0)
    k_h, k_e, k_w, k_b = jax.random.split(key, 4)

    # deterministic "parameters" (nn.Linear(hidden, hidden) weight + bias)
    bound = 1.0 / (HIDDEN ** 0.5)
    weight = jax.random.uniform(k_w, (HIDDEN, HIDDEN), jnp.float32, -bound, bound)
    bias = jax.random.uniform(k_b, (HIDDEN,), jnp.float32, -bound, bound)

    # deterministic inputs
    hidden = jax.random.normal(k_h, (HIDDEN,), jnp.float32)
    encoder_outputs = jax.random.normal(k_e, (SEQ_LEN, HIDDEN), jnp.float32)

    out = attn_forward(hidden, encoder_outputs, weight, bias)
    out = jax.block_until_ready(out)

    ref = attn_forward_ref(hidden, encoder_outputs, weight, bias)
    assert out.shape == (1, 1, SEQ_LEN), out.shape
    assert jnp.allclose(out, ref, atol=1e-5, rtol=1e-5), (out, ref)

    print("KERNEL_OK")
</pallas_src>

<mosaic_0001>
module attributes {stable_mosaic.version = 11 : i64} {
  func.func @_scores_kernel(%arg0: i32, %arg1: memref<1x32xf32, #tpu.memory_space<vmem>>, %arg2: memref<8x32xf32, #tpu.memory_space<vmem>>, %arg3: memref<1x8xf32, #tpu.memory_space<vmem>>) attributes {dimension_semantics = [#tpu.dimension_semantics<parallel>], iteration_bounds = array<i64: 1>, scalar_prefetch = 0 : i64, scratch_operands = 0 : i64, tpu.core_type = #tpu.core_type<tc>, window_params = [{pipeline_mode = #tpu.pipeline_mode<synchronous>, transform_indices = @transform_0, window_bounds = array<i64: 1, 32>}, {transform_indices = @transform_1, window_bounds = array<i64: 8, 32>}, {transform_indices = @transform_2, window_bounds = array<i64: 1, 8>}]} {
    %c0 = arith.constant 0 : index
    %c0_0 = arith.constant 0 : index
    %0 = vector.load %arg1[%c0, %c0_0] : memref<1x32xf32, #tpu.memory_space<vmem>>, vector<1x32xf32>
    %c0_1 = arith.constant 0 : index
    %c0_2 = arith.constant 0 : index
    %1 = vector.load %arg2[%c0_1, %c0_2] : memref<8x32xf32, #tpu.memory_space<vmem>>, vector<8x32xf32>
    %cst = arith.constant dense<0.000000e+00> : vector<1x8xf32>
    %2 = tpu.matmul %0, %1, %cst {dimension_numbers = #tpu.dot_dimension_numbers<[1], [1], [0], [0], [0, 0, 1, 0], [], []>} : vector<1x32xf32>, vector<8x32xf32>, vector<1x8xf32> -> vector<1x8xf32>
    %c0_3 = arith.constant 0 : index
    %c0_4 = arith.constant 0 : index
    %3 = vector.load %arg3[%c0_3, %c0_4] : memref<1x8xf32, #tpu.memory_space<vmem>>, vector<1x8xf32>
    tpu.vector_store %arg3[%c0_3, %c0_4], %2 {strides = array<i32>} : memref<1x8xf32, #tpu.memory_space<vmem>>, vector<1x8xf32>,
    return
  }
  func.func @transform_0(%arg0: i32) -> (i32, i32) {
    %c0_i32 = arith.constant 0 : i32
    %c0_i32_0 = arith.constant 0 : i32
    %c0_i32_1 = arith.constant 0 : i32
    return %c0_i32, %c0_i32_0 : i32, i32
  }
  func.func @transform_1(%arg0: i32) -> (i32, i32) {
    %c0_i32 = arith.constant 0 : i32
    %c0_i32_0 = arith.constant 0 : i32
    return %arg0, %c0_i32 : i32, i32
  }
  func.func @transform_2(%arg0: i32) -> (i32, i32) {
    %c0_i32 = arith.constant 0 : i32
    %c0_i32_0 = arith.constant 0 : i32
    return %c0_i32, %arg0 : i32, i32
  }
}

</mosaic_0001>

<llo_original>
// kernel: tpu_custom_call.1
$region0: #{tpu_custom_call.1}
  #allocation0 [shape = 'u32[]', space=smem, size = 0x4, offset = 0x4, fixed_abs, tag = 'smem constant byte address 0x4 - core index']
  #allocation1 [shape = 'u32[72,128]{1,0:T(1,128)}', space=vmem, size = 0x9000, scoped, tag = 'internal scratch']
  %s0 = inlined_call_operand.hbm [shape: f32[1,32], index: 0, kind: input, shape index: {}]
  %s1 = inlined_call_operand.hbm [shape: f32[8,32], index: 1, kind: input, shape index: {}]
  %s2 = inlined_call_operand.hbm [shape: f32[1,8], index: 2, kind: output, shape index: {}]
  %s3 = sld [smem:[#allocation0]]
  $region26: #{tpu_custom_call.1} parent=0
    _
  %s5 = ssub.s32 1, %s3
  %s6 = scalar_select 0, %s5, %s3
  $region1: #{tpu_custom_call.1} parent=0
    #allocation2 [shape = 'u8[512]{0}', space=vmem, size = 0x400, scoped, tag = 'input window, operand 0, single buffered']
    #allocation3 [shape = 's32[1]{0}', space=sflag, size = 0x4, scoped, tag = 'scoped memory for tpu_custom_call.1']
    #allocation4 [shape = 's32[1]{0}', space=sflag, size = 0x4, scoped, tag = 'scoped memory for tpu_custom_call.1']
    #allocation5 [shape = 'u8[4096]{0}', space=vmem, size = 0x1000, scoped, tag = 'input window, operand 1, single buffered']
    #allocation6 [shape = 's32[1]{0}', space=sflag, size = 0x4, scoped, tag = 'scoped memory for tpu_custom_call.1']
    #allocation7 [shape = 'u8[512]{0}', space=vmem, size = 0x400, scoped, tag = 'output window, operand 0, single buffered']
    %7 = vsyncpa [#allocation3], 0
    %8 = vsyncpa [#allocation6], 0
    %9 = vsyncpa [#allocation4], 0
    // Predicated region
    $region2: #{tpu_custom_call.1} parent=1 // pred_check
      _
    $region3: #{tpu_custom_call.1} parent=1 // pred_check_branch
      %11 = sbr.rel (0) target = $region5
    $region4: #{tpu_custom_call.1} parent=1 // pred_region
      %13 = vsyncadd [#allocation3], 0
      %s15 = sshll.u32 %s0, 4
      %s16 = int_to_ptr.hbm [resolvable:$true] %s15
      %s17 = sshll.u32 [#allocation2], 4
      %s18 = int_to_ptr.vmem [resolvable:$true] %s17
      %20 = dma.hbm_to_vmem [thread:$0]  %s16, 16, %s18, [#allocation3]
    $region5: #{tpu_custom_call.1} parent=1 // pred_fallthru
      _
    // Predicated region
    $region6: #{tpu_custom_call.1} parent=1 // pred_check
      _
    $region7: #{tpu_custom_call.1} parent=1 // pred_check_branch
      %22 = sbr.rel (0) target = $region9
    $region8: #{tpu_custom_call.1} parent=1 // pred_region
      %24 = vsyncadd [#allocation6], 0
      %s26 = sshll.u32 %s1, 4
      %s27 = int_to_ptr.hbm [resolvable:$true] %s26
      %s28 = sshll.u32 [#allocation5], 4
      %s29 = int_to_ptr.vmem [resolvable:$true] %s28
      %31 = dma.hbm_to_vmem [thread:$0]  %s27, 128, %s29, [#allocation6]
    $region9: #{tpu_custom_call.1} parent=1 // pred_fallthru
      _
    // Predicated region
    $region10: #{tpu_custom_call.1} parent=1 // pred_check
      _
    $region11: #{tpu_custom_call.1} parent=1 // pred_check_branch
      %33 = sbr.rel (0) target = $region13
    $region12: #{tpu_custom_call.1} parent=1 // pred_region
      %35 = dma.done [#allocation3], 16
    $region13: #{tpu_custom_call.1} parent=1 // pred_fallthru
      _
    // Predicated region
    $region14: #{tpu_custom_call.1} parent=1 // pred_check
      _
    $region15: #{tpu_custom_call.1} parent=1 // pred_check_branch
      %37 = sbr.rel (0) target = $region17
    $region16: #{tpu_custom_call.1} parent=1 // pred_region
      %39 = dma.done [#allocation6], 128
    $region17: #{tpu_custom_call.1} parent=1 // pred_fallthru
      _
    %v40 = vld [vmem:[#allocation2] sm:$0x1]
    %v41 = vld [vmem:[#allocation5] sm:$0xff]
    %vm42 = vcmask 261120
    %v44 = vsel %vm42, %v40, 0
    %v47 = vsel %vm42, %v41, 0
    %49 = vmatpush.xpose.msra.mxu0 0.0
    %50 = vmatpush.xpose.msra.mxu0 0.0
    %51 = vmatpush.xpose.msra.mxu0 0.0
    %52 = vmatpush.xpose.msra.mxu0 0.0
    %53 = vmatpush.xpose.msra.mxu0 0.0
    %54 = vmatpush.xpose.msra.mxu0 0.0
    %55 = vmatpush.xpose.msra.mxu0 0.0
    %56 = vmatpush.xpose.msra.mxu0 0.0
    %57 = vmatpush.xpose.msra.mxu0 0.0
    %58 = vmatpush.xpose.msra.mxu0 0.0
    %59 = vmatpush.xpose.msra.mxu0 0.0
    %60 = vmatpush.xpose.msra.mxu0 0.0
    %61 = vmatpush.xpose.msra.mxu0 0.0
    %62 = vmatpush.xpose.msra.mxu0 0.0
    %63 = vmatpush.xpose.msra.mxu0 0.0
    %64 = vmatpush.xpose.msra.mxu0 %v47
    %65 = vmatmul.f32.gmra.mxu0 %v44
    %v66 = vpop.f32.mrf.mxu0
    %v67 = vadd.f32 0.0, %v66
    %68 = vdwg.mxu0
    %vm69 = vcmask 57344
    %70 = vst.msk [vmem:[#allocation7] sm:$0x1] %vm69, %v67
    // Predicated region
    $region18: #{tpu_custom_call.1} parent=1 // pred_check
      _
    $region19: #{tpu_custom_call.1} parent=1 // pred_check_branch
      %72 = sbr.rel (0) target = $region21
    $region20: #{tpu_custom_call.1} parent=1 // pred_region
      %74 = vsyncadd [#allocation4], 0
      %s76 = sshll.u32 [#allocation7], 4
      %s77 = int_to_ptr.vmem [resolvable:$true] %s76
      %s78 = sshll.u32 %s2, 4
      %s79 = int_to_ptr.hbm [resolvable:$true] %s78
      %81 = dma.vmem_to_hbm [thread:$0]  %s77, 16, %s79, [#allocation4]
    $region21: #{tpu_custom_call.1} parent=1 // pred_fallthru
      _
    // Predicated region
    $region22: #{tpu_custom_call.1} parent=1 // pred_check
      _
    $region23: #{tpu_custom_call.1} parent=1 // pred_check_branch
      %83 = sbr.rel (0) target = $region25
    $region24: #{tpu_custom_call.1} parent=1 // pred_region
      %85 = dma.done [#allocation4], 16
    $region25: #{tpu_custom_call.1} parent=1 // pred_fallthru
      _
    %86 = vsyncpa [#allocation3], 1
    %87 = vsyncpa [#allocation6], 1
    %88 = vsyncpa [#allocation4], 1

</llo_original>
